<compile_context>
chip_gen: v5e
topology: v5e:2x2
jax: 0.10.0
libtpu: 0.0.40
codegen_flags: <defaults>
</compile_context>

<pallas_src>
import math

import jax
import jax.numpy as jnp
from jax.experimental import pallas as pl
from jax.experimental.pallas import tpu as pltpu


def build_pe_table(max_len: int, d_model: int, dtype=jnp.float32):
    """Deterministic sinusoidal table, shape (max_len, d_model).

    Mirrors the buffer built in PyTorchPositionalEncoding.__init__ (before the
    unsqueeze/transpose, which only adds a broadcast dim of size 1).
    """
    position = jnp.arange(max_len, dtype=jnp.float32)[:, None]
    div_term = jnp.exp(
        jnp.arange(0, d_model, 2, dtype=jnp.float32) * (-math.log(10000.0) / d_model)
    )
    pe = jnp.zeros((max_len, d_model), dtype=jnp.float32)
    pe = pe.at[:, 0::2].set(jnp.sin(position * div_term))
    pe = pe.at[:, 1::2].set(jnp.cos(position * div_term))
    return pe.astype(dtype)


def _sublane_multiple(dtype) -> int:
    # Second-to-last block dim must be a multiple of this (or the full extent).
    return {4: 8, 2: 16, 1: 32}.get(jnp.dtype(dtype).itemsize, 8)


def _default_tile_bytes() -> int:
    # Generation-aware block size:
    #  * v5e: 16 MiB default scoped VMEM -> 2 MiB blocks (~8 MiB double-buffered x+out).
    #  * v6e/v7x: 32 MiB default scoped VMEM + higher HBM BW -> 4 MiB blocks (~16 MiB live).
    try:
        kind = jax.devices()[0].device_kind.lower()
    except Exception:
        return 2 * 1024 * 1024
    if "v6" in kind or "v7" in kind or "7x" in kind:
        return 4 * 1024 * 1024
    return 2 * 1024 * 1024


def _pe_add_kernel(x_ref, pe_ref, o_ref):
    # x_ref: (tb, tl, Nd); pe_ref: (tb, 1, Nd). Sublane-broadcast add is the
    # entire hot path; the kernel is purely HBM-bound.
    o_ref[...] = x_ref[...] + pe_ref[...]


def positional_encoding(
    x: jax.Array,
    pe_table: jax.Array,
    *,
    target_tile_bytes: int | None = None,
    donate_x: bool = False,
) -> jax.Array:
    """out[b, l, n] = x[b, l, n] + pe_table[b, n] (dropout = identity).

    With donate_x=True the output aliases the (folded) input buffer; the HBM
    saving is only realized if the caller donates x into its jit.
    """
    B, L, N = x.shape
    assert B <= pe_table.shape[0] and N == pe_table.shape[1]

    if target_tile_bytes is None:
        target_tile_bytes = _default_tile_bytes()

    itemsize = jnp.dtype(x.dtype).itemsize
    sub = _sublane_multiple(x.dtype)
    pe_b = pe_table[:B].astype(x.dtype)  # (B, N): `self.pe[:x.size(0), :]` squeezed

    # --- Lane-dense folding: fold r consecutive time steps into the lane axis
    # so the last dim is a multiple of 128 lanes. pe is constant across time
    # within a batch row, so tiling it r times keeps the add exact. If L is
    # not a multiple of r, pad (and slice afterwards) rather than reverting to
    # masked partial stores.
    r = 1 if N % 128 == 0 else math.lcm(N, 128) // N
    L_pad = ((L + r - 1) // r) * r
    x_in = x if L_pad == L else jnp.pad(x, ((0, 0), (0, L_pad - L), (0, 0)))

    Lf, Nd = L_pad // r, N * r
    xf = x_in.reshape(B, Lf, Nd)  # contiguous reshape (free)
    # NOTE: if pe_table is static, hoist this tile/cast (or jit the caller) so
    # it is not re-materialized per call.
    pe_f = jnp.tile(pe_b, (1, r)).reshape(B, 1, Nd)  # (B, 1, Nd)

    # --- Tile selection: ~target_tile_bytes per x block. If one batch row is
    # small, pack several whole rows per grid step; otherwise tile time.
    row_bytes = Lf * Nd * itemsize
    if row_bytes >= target_tile_bytes or B == 1:
        tb = 1
        tl = max(sub, (target_tile_bytes // max(1, Nd * itemsize)) // sub * sub)
        tl = min(tl, Lf)
        if tl < Lf and Lf % tl != 0:
            # Prefer a tile that divides Lf: no ragged tail, every vst full-width.
            d = tl
            while d >= sub and Lf % d != 0:
                d -= sub
            if d >= sub:
                tl = d
        if B == 1 and tl == Lf and Lf >= 2 * sub:
            # Megacore (v7x): avoid a single-step grid if the row can be split.
            d = (Lf // 2) // sub * sub
            while d >= sub and Lf % d != 0:
                d -= sub
            if d >= sub:
                tl = d
    else:
        tb = max(1, min(B, target_tile_bytes // row_bytes))
        if tb >= B and B >= 2:
            tb = (B + 1) // 2  # keep >= 2 grid steps for the two v7x TensorCores
        while tb > 1 and B % tb != 0:
            tb -= 1            # full batch tiles only (no ragged blocks)
        tl = Lf

    grid = (pl.cdiv(B, tb), pl.cdiv(Lf, tl))

    out_f = pl.pallas_call(
        _pe_add_kernel,
        out_shape=jax.ShapeDtypeStruct((B, Lf, Nd), x.dtype),
        grid=grid,
        in_specs=[
            pl.BlockSpec((tb, tl, Nd), lambda b, i: (b, i, 0)),
            pl.BlockSpec((tb, 1, Nd), lambda b, i: (b, 0, 0)),
        ],
        out_specs=pl.BlockSpec((tb, tl, Nd), lambda b, i: (b, i, 0)),
        compiler_params=pltpu.CompilerParams(
            dimension_semantics=("parallel", "parallel"),
        ),
        cost_estimate=pl.CostEstimate(
            flops=B * Lf * Nd,
            transcendentals=0,
            bytes_accessed=(2 * B * Lf * Nd + B * Nd) * itemsize,
        ),
        input_output_aliases=({0: 0} if donate_x else {}),
    )(xf, pe_f)

    out = out_f.reshape(B, L_pad, N)
    return out if L_pad == L else out[:, :L, :]


if __name__ == "__main__":
    key = jax.random.PRNGKey(0)
    k1, k2, k3, k4 = jax.random.split(key, 4)

    # 1) Small shapes consistent with the module: x is [B, L, N].
    B, L, N = 2, 8, 32
    x = jax.random.normal(k1, (B, L, N), dtype=jnp.float32)
    pe = build_pe_table(64, N)  # module default max_len=5000; small table suffices
    out = jax.block_until_ready(positional_encoding(x, pe))
    ref = x + pe[:B][:, None, :]  # exact as-written PyTorch semantics
    assert out.shape == (B, L, N)
    assert jnp.allclose(out, ref, atol=1e-6, rtol=1e-6)

    # 2) Lane-folded path (N=64 folded to 128 lanes), batch-blocked grid.
    x2 = jax.random.normal(k2, (2, 256, 64), dtype=jnp.float32)
    pe2 = build_pe_table(512, 64)
    out2 = jax.block_until_ready(positional_encoding(x2, pe2))
    assert jnp.allclose(out2, x2 + pe2[:2][:, None, :], atol=1e-6, rtol=1e-6)

    # 3) Padding path: L not a multiple of the fold factor r (=4 for N=32).
    x3 = jax.random.normal(k3, (2, 10, 32), dtype=jnp.float32)
    pe3 = build_pe_table(16, 32)
    out3 = jax.block_until_ready(positional_encoding(x3, pe3))
    assert jnp.allclose(out3, x3 + pe3[:2][:, None, :], atol=1e-6, rtol=1e-6)

    # 4) Time-tiled path (multi-step grid over L) with a small tile override.
    x4 = jax.random.normal(k4, (1, 512, 128), dtype=jnp.float32)
    pe4 = build_pe_table(8, 128)
    out4 = jax.block_until_ready(
        positional_encoding(x4, pe4, target_tile_bytes=64 * 1024)
    )
    assert jnp.allclose(out4, x4 + pe4[:1][:, None, :], atol=1e-6, rtol=1e-6)

    print("KERNEL_OK")
</pallas_src>

<mosaic_0001>
module attributes {stable_mosaic.version = 11 : i64} {
  func.func @_pe_add_kernel(%arg0: i32, %arg1: i32, %arg2: memref<1x2x128xf32, #tpu.memory_space<vmem>>, %arg3: memref<1x1x128xf32, #tpu.memory_space<vmem>>, %arg4: memref<1x2x128xf32, #tpu.memory_space<vmem>>) attributes {dimension_semantics = [#tpu.dimension_semantics<parallel>, #tpu.dimension_semantics<parallel>], iteration_bounds = array<i64: 2, 1>, scalar_prefetch = 0 : i64, scratch_operands = 0 : i64, tpu.core_type = #tpu.core_type<tc>, window_params = [{transform_indices = @transform_0, window_bounds = array<i64: 1, 2, 128>}, {transform_indices = @transform_1, window_bounds = array<i64: 1, 1, 128>}, {transform_indices = @transform_2, window_bounds = array<i64: 1, 2, 128>}]} {
    %c0 = arith.constant 0 : index
    %c0_0 = arith.constant 0 : index
    %c0_1 = arith.constant 0 : index
    %0 = vector.load %arg2[%c0, %c0_0, %c0_1] : memref<1x2x128xf32, #tpu.memory_space<vmem>>, vector<1x2x128xf32>
    %c0_2 = arith.constant 0 : index
    %c0_3 = arith.constant 0 : index
    %c0_4 = arith.constant 0 : index
    %1 = vector.load %arg3[%c0_2, %c0_3, %c0_4] : memref<1x1x128xf32, #tpu.memory_space<vmem>>, vector<1x1x128xf32>
    %2 = vector.broadcast %1 : vector<1x1x128xf32> to vector<1x2x128xf32>
    %3 = arith.addf %0, %2 : vector<1x2x128xf32>
    %c0_5 = arith.constant 0 : index
    %c0_6 = arith.constant 0 : index
    %c0_7 = arith.constant 0 : index
    %4 = vector.load %arg4[%c0_5, %c0_6, %c0_7] : memref<1x2x128xf32, #tpu.memory_space<vmem>>, vector<1x2x128xf32>
    tpu.vector_store %arg4[%c0_5, %c0_6, %c0_7], %3 {strides = array<i32>} : memref<1x2x128xf32, #tpu.memory_space<vmem>>, vector<1x2x128xf32>,
    return
  }
  func.func @transform_0(%arg0: i32, %arg1: i32) -> (i32, i32, i32) {
    %c0_i32 = arith.constant 0 : i32
    %c0_i32_0 = arith.constant 0 : i32
    return %arg0, %arg1, %c0_i32 : i32, i32, i32
  }
  func.func @transform_1(%arg0: i32, %arg1: i32) -> (i32, i32, i32) {
    %c0_i32 = arith.constant 0 : i32
    %c0_i32_0 = arith.constant 0 : i32
    %c0_i32_1 = arith.constant 0 : i32
    return %arg0, %c0_i32, %c0_i32_0 : i32, i32, i32
  }
  func.func @transform_2(%arg0: i32, %arg1: i32) -> (i32, i32, i32) {
    %c0_i32 = arith.constant 0 : i32
    %c0_i32_0 = arith.constant 0 : i32
    return %arg0, %arg1, %c0_i32 : i32, i32, i32
  }
}

</mosaic_0001>

<llo_original>
// kernel: tpu_custom_call.1
$region0: #{tpu_custom_call.1}
  #allocation0 [shape = 'u32[]', space=smem, size = 0x4, offset = 0x4, fixed_abs, tag = 'smem constant byte address 0x4 - core index']
  #allocation1 [shape = 'u32[72,128]{1,0:T(1,128)}', space=vmem, size = 0x9000, scoped, tag = 'internal scratch']
  %s0 = inlined_call_operand.hbm [shape: f32[2,2,128], index: 0, kind: input, shape index: {}]
  %s1 = inlined_call_operand.hbm [shape: f32[2,1,128], index: 1, kind: input, shape index: {}]
  %s2 = inlined_call_operand.hbm [shape: f32[2,2,128], index: 2, kind: output, shape index: {}]
  %s3 = sld [smem:[#allocation0]]
  $region49: #{tpu_custom_call.1} parent=0
    _
  %s5 = ssub.s32 1, %s3
  %s6 = scalar_select 0, %s5, %s3
  $region1: #{tpu_custom_call.1} parent=0
    #allocation2 [shape = 'u8[2048]{0}', space=vmem, size = 0x800, scoped, tag = 'input window, operand 0']
    #allocation3 [shape = 's32[2]{0}', space=sflag, size = 0x8, scoped, tag = 'scoped memory for tpu_custom_call.1']
    #allocation4 [shape = 's32[2]{0}', space=sflag, size = 0x8, scoped, tag = 'scoped memory for tpu_custom_call.1']
    #allocation5 [shape = 'u8[1024]{0}', space=vmem, size = 0x400, scoped, tag = 'input window, operand 1']
    #allocation6 [shape = 's32[2]{0}', space=sflag, size = 0x8, scoped, tag = 'scoped memory for tpu_custom_call.1']
    #allocation7 [shape = 'u8[2048]{0}', space=vmem, size = 0x800, scoped, tag = 'output window, operand 0']
    %7 = vsyncpa [#allocation3], 0
    %s8 = scalar_lea.sflag [#allocation3], 1
    %9 = vsyncpa %s8, 0
    %10 = vsyncpa [#allocation6], 0
    %s11 = scalar_lea.sflag [#allocation6], 1
    %12 = vsyncpa %s11, 0
    %13 = vsyncpa [#allocation4], 0
    %s14 = scalar_lea.sflag [#allocation4], 1
    %15 = vsyncpa %s14, 0
    loop: start=0, step=1, limit=4
    $region2: #{tpu_custom_call.1} parent=1 // loop_pre_header
      _
    $region3: #{tpu_custom_call.1} parent=1 // loop_header
      %s17 = sphi 0, %s21
      %p18 = scmp.ge.s32.totalorder %s17, 4
      %s24 = sphi 0, %s36
      %s25 = sphi 0, %s32
      %s26 = sphi 0, %s24
      %s27 = sphi 0, %s25
      %s28 = sphi 0, %s26
      %s29 = sphi 0, %s27
      %s41 = sphi 0, %s43
      %s44 = sphi 0, %s41
      %s45 = sphi 0, %s44
      %s61 = sphi 0, %s45
      %s67 = sphi 0, %s69
      %s70 = sphi 0, %s67
      %s71 = sphi 0, %s70
      %s87 = sphi 0, %s71
      %s95 = sphi 0, %s97
      %s98 = sphi 0, %s95
      %s99 = sphi 0, %s98
      %s115 = sphi 0, %s99
    $region4: #{tpu_custom_call.1} parent=1 // loop_header_branch
      %20 = sbr.rel (%p18) target = $region8
    $region5: #{tpu_custom_call.1} parent=1 // loop_body
      %s22 = ssub.s32 %s17, 1
      %s23 = ssub.s32 %s17, 2
      %s30 = sadd.s32 1, %s25
      %p31 = scmp.ge.s32.totalorder %s30, 1
      %s32 = scalar_select %p31, 0, %s30
      %s33 = sadd.s32 1, %s24
      %s34 = scalar_select %p31, %s33, %s24
      %p35 = scmp.ge.s32.totalorder %s34, 2
      %s36 = scalar_select %p35, 0, %s34
      %s37 = ssub.s32 %s24, %s36
      %s38 = ssub.s32 %s25, %s32
      %s39 = sor.u32 %s37, %s38
      %p40 = scmp.eq.s32.totalorder %s39, 0
      %s42 = sadd.s32 %s41, 1
      %s43 = scalar_select %p40, %s41, %s42
      %p46 = pneg %p40
      %p47 = scmp.eq.s32.totalorder %s17, 1
      %p48 = por %p46, %p47
      %p49 = scmp.ne.s32.totalorder %s41, %s44
      %p50 = scmp.eq.s32.totalorder %s17, 0
      %p51 = por %p49, %p50
      %p52 = scmp.ne.s32.totalorder %s41, %s44
      %p53 = scmp.eq.s32.totalorder %s22, 1
      %p54 = por %p52, %p53
      %p55 = scmp.ne.s32.totalorder %s44, %s45
      %p56 = scmp.eq.s32.totalorder %s22, 0
      %p57 = por %p55, %p56
      %p58 = scmp.ne.s32.totalorder %s44, %s45
      %p59 = scmp.eq.s32.totalorder %s23, 1
      %p60 = por %p58, %p59
      %p62 = scmp.ne.s32.totalorder %s45, %s61
      %p63 = scmp.eq.s32.totalorder %s23, 0
      %p64 = por %p62, %p63
      %s65 = ssub.s32 %s24, %s36
      %p66 = scmp.eq.s32.totalorder %s65, 0
      %s68 = sadd.s32 %s67, 1
      %s69 = scalar_select %p66, %s67, %s68
      %p72 = pneg %p66
      %p73 = scmp.eq.s32.totalorder %s17, 1
      %p74 = por %p72, %p73
      %p75 = scmp.ne.s32.totalorder %s67, %s70
      %p76 = scmp.eq.s32.totalorder %s17, 0
      %p77 = por %p75, %p76
      %p78 = scmp.ne.s32.totalorder %s67, %s70
      %p79 = scmp.eq.s32.totalorder %s22, 1
      %p80 = por %p78, %p79
      %p81 = scmp.ne.s32.totalorder %s70, %s71
      %p82 = scmp.eq.s32.totalorder %s22, 0
      %p83 = por %p81, %p82
      %p84 = scmp.ne.s32.totalorder %s70, %s71
      %p85 = scmp.eq.s32.totalorder %s23, 1
      %p86 = por %p84, %p85
      %p88 = scmp.ne.s32.totalorder %s71, %s87
      %p89 = scmp.eq.s32.totalorder %s23, 0
      %p90 = por %p88, %p89
      %s91 = ssub.s32 %s24, %s36
      %s92 = ssub.s32 %s25, %s32
      %s93 = sor.u32 %s91, %s92
      %p94 = scmp.eq.s32.totalorder %s93, 0
      %s96 = sadd.s32 %s95, 1
      %s97 = scalar_select %p94, %s95, %s96
      %p100 = pneg %p94
      %p101 = scmp.eq.s32.totalorder %s17, 1
      %p102 = por %p100, %p101
      %p103 = scmp.ne.s32.totalorder %s95, %s98
      %p104 = scmp.eq.s32.totalorder %s17, 0
      %p105 = por %p103, %p104
      %p106 = scmp.ne.s32.totalorder %s95, %s98
      %p107 = scmp.eq.s32.totalorder %s22, 1
      %p108 = por %p106, %p107
      %p109 = scmp.ne.s32.totalorder %s98, %s99
      %p110 = scmp.eq.s32.totalorder %s22, 0
      %p111 = por %p109, %p110
      %p112 = scmp.ne.s32.totalorder %s98, %s99
      %p113 = scmp.eq.s32.totalorder %s23, 1
      %p114 = por %p112, %p113
      %p116 = scmp.ne.s32.totalorder %s99, %s115
      %p117 = scmp.eq.s32.totalorder %s23, 0
      %p118 = por %p116, %p117
      %p119 = scmp.le.s32.totalorder 1, %s17
      %p120 = scmp.lt.s32.totalorder %s17, 3
      %p121 = pnand %p119, %p120
      %p122 = pneg %p121
      // Predicated region
      $region9: #{tpu_custom_call.1} parent=5 // pred_check
        _
      $region10: #{tpu_custom_call.1} parent=5 // pred_check_branch
        %124 = sbr.rel (%p121) target = $region12
      $region11: #{tpu_custom_call.1} parent=5 // pred_region
        %s125 = ssub.s32 %s17, 1
      $region12: #{tpu_custom_call.1} parent=5 // pred_fallthru
        _
      %p126 = scmp.lt.s32.totalorder %s17, 2
      // Predicated region
      $region13: #{tpu_custom_call.1} parent=5 // pred_check
        %p127 = pneg %p126
      $region14: #{tpu_custom_call.1} parent=5 // pred_check_branch
        %129 = sbr.rel (%p127) target = $region16
      $region15: #{tpu_custom_call.1} parent=5 // pred_region
        // Predicated region
        $region17: #{tpu_custom_call.1} parent=15 // pred_check
          %p130 = pneg %p51
        $region18: #{tpu_custom_call.1} parent=15 // pred_check_branch
          %132 = sbr.rel (%p130) target = $region20
        $region19: #{tpu_custom_call.1} parent=15 // pred_region
          %s133 = sand.u32 %s41, 1
          %s134 = scalar_lea.sflag [#allocation3], %s133
          %s135 = sand.u32 %s41, 1
          %s136 = smul.addr %s135, 2
          %s137 = scalar_lea.vmem [#allocation2], %s136
          %139 = vsyncadd %s134, 0
          %s140 = sadd.s32 %s25, %s24
          %s141 = smul.addr %s140, 2
          %s142 = scalar_lea.hbm %s0, %s141
          %s144 = sshll.u32 %s142, 4
          %s145 = int_to_ptr.hbm [resolvable:$true] %s144
          %s146 = sshll.u32 %s137, 4
          %s147 = int_to_ptr.vmem [resolvable:$true] %s146
          %149 = dma.hbm_to_vmem [thread:$0]  %s145, 32, %s147, %s134
        $region20: #{tpu_custom_call.1} parent=15 // pred_fallthru
          _
        // Predicated region
        $region21: #{tpu_custom_call.1} parent=15 // pred_check
          %p150 = pneg %p77
        $region22: #{tpu_custom_call.1} parent=15 // pred_check_branch
          %152 = sbr.rel (%p150) target = $region24
        $region23: #{tpu_custom_call.1} parent=15 // pred_region
          %s153 = sand.u32 %s67, 1
          %s154 = scalar_lea.sflag [#allocation6], %s153
          %s155 = sand.u32 %s67, 1
          %s156 = scalar_lea.vmem [#allocation5], %s155
          %158 = vsyncadd %s154, 0
          %s159 = scalar_lea.hbm %s1, %s24
          %s161 = sshll.u32 %s159, 4
          %s162 = int_to_ptr.hbm [resolvable:$true] %s161
          %s163 = sshll.u32 %s156, 4
          %s164 = int_to_ptr.vmem [resolvable:$true] %s163
          %166 = dma.hbm_to_vmem [thread:$0]  %s162, 16, %s164, %s154
        $region24: #{tpu_custom_call.1} parent=15 // pred_fallthru
          _
      $region16: #{tpu_custom_call.1} parent=5 // pred_fallthru
        _
      %p167 = scmp.le.s32.totalorder 1, %s17
      %p168 = scmp.lt.s32.totalorder %s17, 3
      %p169 = pnand %p167, %p168
      %p170 = pneg %p169
      // Predicated region
      $region25: #{tpu_custom_call.1} parent=5 // pred_check
        _
      $region26: #{tpu_custom_call.1} parent=5 // pred_check_branch
        %172 = sbr.rel (%p169) target = $region28
      $region27: #{tpu_custom_call.1} parent=5 // pred_region
        %s173 = ssub.s32 %s17, 1
        %s174 = sand.u32 %s44, 1
        %s175 = scalar_lea.sflag [#allocation3], %s174
        %s176 = sand.u32 %s44, 1
        %s177 = smul.addr %s176, 2
        %s178 = scalar_lea.vmem [#allocation2], %s177
        // Predicated region
        $region29: #{tpu_custom_call.1} parent=27 // pred_check
          %p179 = pneg %p57
        $region30: #{tpu_custom_call.1} parent=27 // pred_check_branch
          %181 = sbr.rel (%p179) target = $region32
        $region31: #{tpu_custom_call.1} parent=27 // pred_region
          %183 = dma.done %s175, 32
        $region32: #{tpu_custom_call.1} parent=27 // pred_fallthru
          _
        %s184 = sand.u32 %s70, 1
        %s185 = scalar_lea.sflag [#allocation6], %s184
        %s186 = sand.u32 %s70, 1
        %s187 = scalar_lea.vmem [#allocation5], %s186
        // Predicated region
        $region33: #{tpu_custom_call.1} parent=27 // pred_check
          %p188 = pneg %p83
        $region34: #{tpu_custom_call.1} parent=27 // pred_check_branch
          %190 = sbr.rel (%p188) target = $region36
        $region35: #{tpu_custom_call.1} parent=27 // pred_region
          %192 = dma.done %s185, 16
        $region36: #{tpu_custom_call.1} parent=27 // pred_fallthru
          _
        %s193 = sand.u32 %s44, 1
        %s194 = scalar_lea.sflag [#allocation3], %s193
        %s195 = sand.u32 %s44, 1
        %s196 = smul.addr %s195, 2
        %s197 = scalar_lea.vmem [#allocation2], %s196
        %p198 = pneg %p57
        %p199 = pneg %p54
        %s200 = sand.u32 %s70, 1
        %s201 = scalar_lea.sflag [#allocation6], %s200
        %s202 = sand.u32 %s70, 1
        %s203 = scalar_lea.vmem [#allocation5], %s202
        %p204 = pneg %p83
        %p205 = pneg %p80
        %p206 = pneg %p111
        %p207 = pneg %p108
        %s208 = sand.u32 %s98, 1
        %s209 = scalar_lea.sflag [#allocation4], %s208
        %s210 = sand.u32 %s98, 1
        %s211 = smul.addr %s210, 2
        %s212 = scalar_lea.vmem [#allocation7], %s211
        %v213 = vld [vmem:[%s178] sm:$0x3]
        %v214 = vld [vmem:[%s187] sm:$0x1]
        %v216 = vperm.slane %v214, 0
        %v218 = vadd.f32 %v213, %v216
        %219 = vst [vmem:[%s212] sm:$0x3] %v218
        %s220 = sand.u32 %s98, 1
        %s221 = scalar_lea.sflag [#allocation4], %s220
        %s222 = sand.u32 %s98, 1
        %s223 = smul.addr %s222, 2
        %s224 = scalar_lea.vmem [#allocation7], %s223
        // Predicated region
        $region37: #{tpu_custom_call.1} parent=27 // pred_check
          %p225 = pneg %p108
        $region38: #{tpu_custom_call.1} parent=27 // pred_check_branch
          %227 = sbr.rel (%p225) target = $region40
        $region39: #{tpu_custom_call.1} parent=27 // pred_region
          %229 = vsyncadd %s221, 0
          %s230 = sadd.s32 %s27, %s26
          %s231 = smul.addr %s230, 2
          %s232 = scalar_lea.hbm %s2, %s231
          %s234 = sshll.u32 %s224, 4
          %s235 = int_to_ptr.vmem [resolvable:$true] %s234
          %s236 = sshll.u32 %s232, 4
          %s237 = int_to_ptr.hbm [resolvable:$true] %s236
          %239 = dma.vmem_to_hbm [thread:$0]  %s235, 32, %s237, %s221
        $region40: #{tpu_custom_call.1} parent=27 // pred_fallthru
          _
      $region28: #{tpu_custom_call.1} parent=5 // pred_fallthru
        _
      %p240 = scmp.le.s32.totalorder 2, %s17
      // Predicated region
      $region41: #{tpu_custom_call.1} parent=5 // pred_check
        %p241 = pneg %p240
      $region42: #{tpu_custom_call.1} parent=5 // pred_check_branch
        %243 = sbr.rel (%p241) target = $region44
      $region43: #{tpu_custom_call.1} parent=5 // pred_region
        %s244 = ssub.s32 %s17, 2
        // Predicated region
        $region45: #{tpu_custom_call.1} parent=43 // pred_check
          %p245 = pneg %p114
        $region46: #{tpu_custom_call.1} parent=43 // pred_check_branch
          %247 = sbr.rel (%p245) target = $region48
        $region47: #{tpu_custom_call.1} parent=43 // pred_region
          %s248 = sand.u32 %s99, 1
          %s249 = scalar_lea.sflag [#allocation4], %s248
          %s250 = sand.u32 %s99, 1
          %s251 = smul.addr %s250, 2
          %s252 = scalar_lea.vmem [#allocation7], %s251
          %254 = dma.done %s249, 32
        $region48: #{tpu_custom_call.1} parent=43 // pred_fallthru
          _
      $region44: #{tpu_custom_call.1} parent=5 // pred_fallthru
        _
    $region6: #{tpu_custom_call.1} parent=1 // loop_footer
      %s21 = sadd.s32 1, %s17
    $region7: #{tpu_custom_call.1} parent=1 // loop_footer_branch
      %16 = sbr.rel target = $region3
    $region8: #{tpu_custom_call.1} parent=1 // loop_exit
      _
    %255 = vsyncpa [#allocation3], 1
    %s256 = scalar_lea.sflag [#allocation3], 1
    %257 = vsyncpa %s256, 1
    %258 = vsyncpa [#allocation6], 1
    %s259 = scalar_lea.sflag [#allocation6], 1
    %260 = vsyncpa %s259, 1
    %261 = vsyncpa [#allocation4], 1
    %s262 = scalar_lea.sflag [#allocation4], 1
    %263 = vsyncpa %s262, 1

</llo_original>
